<compile_context>
chip_gen: v7x
topology: tpu7x:2x2x1
jax: 0.10.0
libtpu: 0.0.40
codegen_flags: <defaults>
</compile_context>

<pallas_src>
import functools

import jax
import jax.numpy as jnp
import numpy as np
from jax.experimental import pallas as pl
from jax.experimental.pallas import tpu as pltpu

NEG_SLOPE = 0.01   # nn.LeakyReLU default negative_slope
PRELU_A = 0.5      # nn.PReLU(init=0.5), single shared parameter
_HI = jax.lax.Precision.HIGHEST   # reference only


# ----------------------------- fused kernel ---------------------------------

def _fused_model_kernel(*refs, B, L, pad, K, has_ds):
    """Whole model in one kernel invocation (no grid).

    refs = [x, (w1f, b1, w2f, b2[, wd, bd]) per block, w_head, b_head, o]
      x      : (B, C_in, L)
      w*f    : (C_out, K*C_in)   weight-normed conv weight, im2col-flattened
               (row index = t*C_in + c, i.e. w_f[o, t*C_in + c] = w[o, c, t])
      b*     : (C_out, 1)
      wd, bd : (C_out, C_in), (C_out, 1)   1x1 downsample (only if C_in != C_out)
      w_head : (C_last, 1),  b_head : (1, 1)
      o      : (B, L)
    """
    Lpad = L + 2 * pad
    W = B * Lpad - (K - 1)          # width of the shifted ("valid") conv output
    f32 = jnp.float32

    it = iter(refs)
    x_ref = next(it)
    blocks = []
    for ds in has_ds:
        w1 = next(it); b1 = next(it); w2 = next(it); b2 = next(it)
        wd = next(it) if ds else None
        bd = next(it) if ds else None
        blocks.append((w1, b1, w2, b2, wd, bd))
    wh_ref = next(it)
    bh_ref = next(it)
    o_ref = next(it)

    def to_slab(y):
        # y: (C, W); valid output columns are j = b*Lpad + l with l in [0, L).
        # Re-embed them per batch segment with fresh zero pad columns.
        z = jnp.zeros((y.shape[0], pad), f32)
        parts = []
        for b in range(B):
            parts += [z, y[:, b * Lpad:b * Lpad + L], z]
        return jnp.concatenate(parts, axis=1)           # (C, B*Lpad)

    def conv(slab, w_ref, b_ref):
        # Single im2col matmul over all batches: stack K shifted slab slices
        # (tap-major rows) and contract once on the MXU.
        cols = jnp.concatenate([slab[:, t:t + W] for t in range(K)], axis=0)
        return jnp.dot(w_ref[...], cols, preferred_element_type=f32) + b_ref[...]

    def leaky(v):
        return jnp.where(v >= 0, v, NEG_SLOPE * v)

    # Build the input slab (C_in, B*Lpad) directly from the per-batch refs.
    c_in = x_ref.shape[1]
    z_in = jnp.zeros((c_in, pad), f32)
    parts = []
    for b in range(B):
        parts += [z_in, x_ref[b], z_in]
    slab = jnp.concatenate(parts, axis=1)

    for (w1, b1, w2, b2, wd, bd) in blocks:
        h1 = leaky(conv(slab, w1, b1))            # conv1 + LeakyReLU (dropout=id)
        h2 = leaky(conv(to_slab(h1), w2, b2))     # conv2 + LeakyReLU (dropout=id)
        xc = slab[:, pad:pad + W]                 # input at the output positions
        if wd is not None:
            res = jnp.dot(wd[...], xc, preferred_element_type=f32) + bd[...]
        else:
            res = xc
        y = h2 + res
        y = jnp.where(y >= 0, y, PRELU_A * y)     # PReLU(alpha=0.5)
        slab = to_slab(y)

    # Head: 1x1 conv (C_last -> 1) as VPU multiply + sublane reduce, then tanh.
    yv = slab[:, pad:pad + W]                     # (C_last, W)
    h = jnp.sum(wh_ref[...] * yv, axis=0, keepdims=True) + bh_ref[...]
    h = jnp.tanh(h)                               # (1, W)
    # Extract the L valid columns per batch  ==  torch `out[:, 0]` -> (B, L).
    out = jnp.concatenate([h[:, b * Lpad:b * Lpad + L] for b in range(B)], axis=0)
    o_ref[...] = out


# ----------------------------- wrapper ---------------------------------------

def model_forward(x, block_params, w_head_col, b_head, *, K, pad):
    """x: (B, C_in, L); w_head_col: (C_last, 1); b_head: (1, 1) -> (B, L)."""
    B, _, L = x.shape
    has_ds = tuple(p["wd"] is not None for p in block_params)

    args = [x]
    for p in block_params:
        args += [p["w1f"], p["b1"], p["w2f"], p["b2"]]
        if p["wd"] is not None:
            args += [p["wd"], p["bd"]]
    args += [w_head_col, b_head]

    kernel = functools.partial(_fused_model_kernel, B=B, L=L, pad=pad, K=K,
                               has_ds=has_ds)
    vmem = pl.BlockSpec(memory_space=pltpu.MemorySpace.VMEM)
    return pl.pallas_call(
        kernel,
        out_shape=jax.ShapeDtypeStruct((B, L), jnp.float32),
        in_specs=[vmem] * len(args),
        out_specs=vmem,
    )(*args)


# --------------------------- parameter setup ---------------------------------

def _apply_weight_norm(v, g):
    # PyTorch weight_norm (dim=0): w = g * v / ||v||, norm over dims (1, 2)
    norm = jnp.sqrt(jnp.sum(v * v, axis=(1, 2), keepdims=True))
    return g.reshape(-1, 1, 1) * v / norm


def init_params(key, seq_len, num_channels, kernel_size):
    blocks = []
    c_prev = seq_len
    for c in num_channels:
        key, *ks = jax.random.split(key, 9)
        v1 = 0.01 * jax.random.normal(ks[0], (c, c_prev, kernel_size), jnp.float32)
        g1 = 1.0 + 0.1 * jax.random.normal(ks[1], (c,), jnp.float32)
        w1 = _apply_weight_norm(v1, g1)                 # (C_out, C_in, K)
        b1 = 0.05 * jax.random.normal(ks[2], (c, 1), jnp.float32)
        v2 = 0.01 * jax.random.normal(ks[3], (c, c, kernel_size), jnp.float32)
        g2 = 1.0 + 0.1 * jax.random.normal(ks[4], (c,), jnp.float32)
        w2 = _apply_weight_norm(v2, g2)
        b2 = 0.05 * jax.random.normal(ks[5], (c, 1), jnp.float32)
        if c_prev != c:
            wd = 0.01 * jax.random.normal(ks[6], (c, c_prev), jnp.float32)
            bd = 0.05 * jax.random.normal(ks[7], (c, 1), jnp.float32)
        else:
            wd, bd = None, None
        blocks.append(dict(
            w1=w1, b1=b1, w2=w2, b2=b2, wd=wd, bd=bd,
            # im2col flattening, tap-major rows: w_f[o, t*C_in + c] = w[o, c, t]
            w1f=jnp.transpose(w1, (0, 2, 1)).reshape(c, kernel_size * c_prev),
            w2f=jnp.transpose(w2, (0, 2, 1)).reshape(c, kernel_size * c),
        ))
        c_prev = c
    key, k1, k2 = jax.random.split(key, 3)
    w_head = 0.1 * jax.random.normal(k1, (1, c_prev), jnp.float32)
    b_head = 0.05 * jax.random.normal(k2, (1, 1), jnp.float32)
    return blocks, w_head, b_head


# --------------------------- pure-JAX reference -------------------------------

def _ref_conv1d(x, w, b, pad):
    # x: (B, C_in, L), w: (C_out, C_in, K), b: (C_out, 1)
    Kk = w.shape[-1]
    L = x.shape[-1]
    xp = jnp.pad(x, ((0, 0), (0, 0), (pad, pad)))
    acc = jnp.zeros((x.shape[0], w.shape[0], L), jnp.float32)
    for t in range(Kk):
        acc = acc + jnp.einsum("oc,bcl->bol", w[:, :, t], xp[:, :, t:t + L],
                               precision=_HI)
    return acc + b[None]


def ref_forward(x, block_params, w_head, b_head, *, K, pad):
    out = x
    for p in block_params:
        h = _ref_conv1d(out, p["w1"], p["b1"], pad)
        h = jnp.where(h >= 0, h, NEG_SLOPE * h)
        h = _ref_conv1d(h, p["w2"], p["b2"], pad)
        h = jnp.where(h >= 0, h, NEG_SLOPE * h)
        if p["wd"] is not None:
            res = jnp.einsum("oc,bcl->bol", p["wd"], out, precision=_HI) + p["bd"][None]
        else:
            res = out
        y = h + res
        out = jnp.where(y >= 0, y, PRELU_A * y)
    y = jnp.einsum("oc,bcl->bol", w_head, out, precision=_HI) + b_head[None]
    return jnp.tanh(y)[:, 0]


# ------------------------------- main ----------------------------------------

if __name__ == "__main__":
    # hp: seq_len=8 (input channels), num_channels=[16, 16], kernel_size=3,
    #     padding=1 (keeps length), dropout inactive (eval); hidden_dim = 16.
    SEQ_LEN = 8
    NUM_CHANNELS = [16, 16]
    KERNEL_SIZE = 3
    PADDING = 1
    BATCH = 2
    HIDDEN = 16

    key = jax.random.PRNGKey(0)
    key, pkey, xkey = jax.random.split(key, 3)
    block_params, w_head, b_head = init_params(pkey, SEQ_LEN, NUM_CHANNELS,
                                               KERNEL_SIZE)
    w_head_col = jnp.transpose(w_head)      # (C_last, 1) for the in-kernel head
    # input: (currentBatchSize, seqLen, hiddenDim)
    x = jax.random.normal(xkey, (BATCH, SEQ_LEN, HIDDEN), jnp.float32)

    out = model_forward(x, block_params, w_head_col, b_head,
                        K=KERNEL_SIZE, pad=PADDING)
    out = jax.block_until_ready(out)

    ref = jax.block_until_ready(
        ref_forward(x, block_params, w_head, b_head, K=KERNEL_SIZE, pad=PADDING))

    assert out.shape == (BATCH, HIDDEN), out.shape
    # Kernel matmuls use default MXU precision (per perf feedback, HIGHEST was
    # dropped); the reference is computed at HIGHEST, so tolerance is sized for
    # bf16-pass rounding on values of magnitude ~1e-1.
    np.testing.assert_allclose(np.asarray(out), np.asarray(ref),
                               rtol=2e-2, atol=2e-3)
    print("KERNEL_OK")
</pallas_src>

<mosaic_0001>
module attributes {stable_mosaic.version = 11 : i64} {
  func.func @_fused_model_kernel(%arg0: memref<2x8x16xf32, #tpu.memory_space<vmem>>, %arg1: memref<16x24xf32, #tpu.memory_space<vmem>>, %arg2: memref<16x1xf32, #tpu.memory_space<vmem>>, %arg3: memref<16x48xf32, #tpu.memory_space<vmem>>, %arg4: memref<16x1xf32, #tpu.memory_space<vmem>>, %arg5: memref<16x8xf32, #tpu.memory_space<vmem>>, %arg6: memref<16x1xf32, #tpu.memory_space<vmem>>, %arg7: memref<16x48xf32, #tpu.memory_space<vmem>>, %arg8: memref<16x1xf32, #tpu.memory_space<vmem>>, %arg9: memref<16x48xf32, #tpu.memory_space<vmem>>, %arg10: memref<16x1xf32, #tpu.memory_space<vmem>>, %arg11: memref<16x1xf32, #tpu.memory_space<vmem>>, %arg12: memref<1x1xf32, #tpu.memory_space<vmem>>, %arg13: memref<2x16xf32, #tpu.memory_space<vmem>>) attributes {dimension_semantics = [], scalar_prefetch = 0 : i64, scratch_operands = 0 : i64, tpu.core_type = #tpu.core_type<tc>} {
    %cst = arith.constant 0.000000e+00 : f32
    %0 = vector.broadcast %cst : f32 to vector<8x1xf32>
    %c0 = arith.constant 0 : index
    %c0_0 = arith.constant 0 : index
    %c0_1 = arith.constant 0 : index
    %1 = vector.load %arg0[%c0, %c0_0, %c0_1] : memref<2x8x16xf32, #tpu.memory_space<vmem>>, vector<1x8x16xf32>
    %2 = vector.shape_cast %1 : vector<1x8x16xf32> to vector<8x16xf32>
    %c1 = arith.constant 1 : index
    %c0_2 = arith.constant 0 : index
    %c0_3 = arith.constant 0 : index
    %3 = vector.load %arg0[%c1, %c0_2, %c0_3] : memref<2x8x16xf32, #tpu.memory_space<vmem>>, vector<1x8x16xf32>
    %4 = vector.shape_cast %3 : vector<1x8x16xf32> to vector<8x16xf32>
    %5 = tpu.concatenate %0, %2, %0, %0, %4, %0 in 1 : vector<8x1xf32>, vector<8x16xf32>, vector<8x1xf32>, vector<8x1xf32>, vector<8x16xf32>, vector<8x1xf32> -> vector<8x36xf32>
    %6 = vector.extract_strided_slice %5 {offsets = [0, 0], sizes = [8, 34], strides = [1, 1]} : vector<8x36xf32> to vector<8x34xf32>
    %7 = vector.extract_strided_slice %5 {offsets = [0, 1], sizes = [8, 34], strides = [1, 1]} : vector<8x36xf32> to vector<8x34xf32>
    %8 = vector.extract_strided_slice %5 {offsets = [0, 2], sizes = [8, 34], strides = [1, 1]} : vector<8x36xf32> to vector<8x34xf32>
    %9 = tpu.concatenate %6, %7, %8 in 0 : vector<8x34xf32>, vector<8x34xf32>, vector<8x34xf32> -> vector<24x34xf32>
    %c0_4 = arith.constant 0 : index
    %c0_5 = arith.constant 0 : index
    %10 = vector.load %arg1[%c0_4, %c0_5] : memref<16x24xf32, #tpu.memory_space<vmem>>, vector<16x24xf32>
    %cst_6 = arith.constant dense<0.000000e+00> : vector<16x34xf32>
    %11 = tpu.matmul %10, %9, %cst_6 {dimension_numbers = #tpu.dot_dimension_numbers<[1], [0], [0], [1], [0, 0, 1, 1], [], []>} : vector<16x24xf32>, vector<24x34xf32>, vector<16x34xf32> -> vector<16x34xf32>
    %c0_7 = arith.constant 0 : index
    %c0_8 = arith.constant 0 : index
    %12 = vector.load %arg2[%c0_7, %c0_8] : memref<16x1xf32, #tpu.memory_space<vmem>>, vector<16x1xf32>
    %13 = vector.broadcast %12 : vector<16x1xf32> to vector<16x34xf32>
    %14 = arith.addf %11, %13 : vector<16x34xf32>
    %cst_9 = arith.constant 0.000000e+00 : f32
    %15 = vector.broadcast %cst_9 : f32 to vector<16x34xf32>
    %16 = arith.cmpf oge, %14, %15 : vector<16x34xf32>
    %cst_10 = arith.constant 0.00999999977 : f32
    %17 = vector.broadcast %cst_10 : f32 to vector<16x34xf32>
    %18 = arith.mulf %17, %14 : vector<16x34xf32>
    %19 = arith.select %16, %14, %18 : vector<16x34xi1>, vector<16x34xf32>
    %cst_11 = arith.constant 0.000000e+00 : f32
    %20 = vector.broadcast %cst_11 : f32 to vector<16x1xf32>
    %21 = vector.extract_strided_slice %19 {offsets = [0, 0], sizes = [16, 16], strides = [1, 1]} : vector<16x34xf32> to vector<16x16xf32>
    %22 = vector.extract_strided_slice %19 {offsets = [0, 18], sizes = [16, 16], strides = [1, 1]} : vector<16x34xf32> to vector<16x16xf32>
    %23 = tpu.concatenate %20, %21, %20, %20, %22, %20 in 1 : vector<16x1xf32>, vector<16x16xf32>, vector<16x1xf32>, vector<16x1xf32>, vector<16x16xf32>, vector<16x1xf32> -> vector<16x36xf32>
    %24 = vector.extract_strided_slice %23 {offsets = [0, 0], sizes = [16, 34], strides = [1, 1]} : vector<16x36xf32> to vector<16x34xf32>
    %25 = vector.extract_strided_slice %23 {offsets = [0, 1], sizes = [16, 34], strides = [1, 1]} : vector<16x36xf32> to vector<16x34xf32>
    %26 = vector.extract_strided_slice %23 {offsets = [0, 2], sizes = [16, 34], strides = [1, 1]} : vector<16x36xf32> to vector<16x34xf32>
    %27 = tpu.concatenate %24, %25, %26 in 0 : vector<16x34xf32>, vector<16x34xf32>, vector<16x34xf32> -> vector<48x34xf32>
    %c0_12 = arith.constant 0 : index
    %c0_13 = arith.constant 0 : index
    %28 = vector.load %arg3[%c0_12, %c0_13] : memref<16x48xf32, #tpu.memory_space<vmem>>, vector<16x48xf32>
    %cst_14 = arith.constant dense<0.000000e+00> : vector<16x34xf32>
    %29 = tpu.matmul %28, %27, %cst_14 {dimension_numbers = #tpu.dot_dimension_numbers<[1], [0], [0], [1], [0, 0, 1, 1], [], []>} : vector<16x48xf32>, vector<48x34xf32>, vector<16x34xf32> -> vector<16x34xf32>
    %c0_15 = arith.constant 0 : index
    %c0_16 = arith.constant 0 : index
    %30 = vector.load %arg4[%c0_15, %c0_16] : memref<16x1xf32, #tpu.memory_space<vmem>>, vector<16x1xf32>
    %31 = vector.broadcast %30 : vector<16x1xf32> to vector<16x34xf32>
    %32 = arith.addf %29, %31 : vector<16x34xf32>
    %cst_17 = arith.constant 0.000000e+00 : f32
    %33 = vector.broadcast %cst_17 : f32 to vector<16x34xf32>
    %34 = arith.cmpf oge, %32, %33 : vector<16x34xf32>
    %cst_18 = arith.constant 0.00999999977 : f32
    %35 = vector.broadcast %cst_18 : f32 to vector<16x34xf32>
    %36 = arith.mulf %35, %32 : vector<16x34xf32>
    %37 = arith.select %34, %32, %36 : vector<16x34xi1>, vector<16x34xf32>
    %38 = vector.extract_strided_slice %5 {offsets = [0, 1], sizes = [8, 34], strides = [1, 1]} : vector<8x36xf32> to vector<8x34xf32>
    %c0_19 = arith.constant 0 : index
    %c0_20 = arith.constant 0 : index
    %39 = vector.load %arg5[%c0_19, %c0_20] : memref<16x8xf32, #tpu.memory_space<vmem>>, vector<16x8xf32>
    %cst_21 = arith.constant dense<0.000000e+00> : vector<16x34xf32>
    %40 = tpu.matmul %39, %38, %cst_21 {dimension_numbers = #tpu.dot_dimension_numbers<[1], [0], [0], [1], [0, 0, 1, 1], [], []>} : vector<16x8xf32>, vector<8x34xf32>, vector<16x34xf32> -> vector<16x34xf32>
    %c0_22 = arith.constant 0 : index
    %c0_23 = arith.constant 0 : index
    %41 = vector.load %arg6[%c0_22, %c0_23] : memref<16x1xf32, #tpu.memory_space<vmem>>, vector<16x1xf32>
    %42 = vector.broadcast %41 : vector<16x1xf32> to vector<16x34xf32>
    %43 = arith.addf %40, %42 : vector<16x34xf32>
    %44 = arith.addf %37, %43 : vector<16x34xf32>
    %cst_24 = arith.constant 0.000000e+00 : f32
    %45 = vector.broadcast %cst_24 : f32 to vector<16x34xf32>
    %46 = arith.cmpf oge, %44, %45 : vector<16x34xf32>
    %cst_25 = arith.constant 5.000000e-01 : f32
    %47 = vector.broadcast %cst_25 : f32 to vector<16x34xf32>
    %48 = arith.mulf %47, %44 : vector<16x34xf32>
    %49 = arith.select %46, %44, %48 : vector<16x34xi1>, vector<16x34xf32>
    %cst_26 = arith.constant 0.000000e+00 : f32
    %50 = vector.broadcast %cst_26 : f32 to vector<16x1xf32>
    %51 = vector.extract_strided_slice %49 {offsets = [0, 0], sizes = [16, 16], strides = [1, 1]} : vector<16x34xf32> to vector<16x16xf32>
    %52 = vector.extract_strided_slice %49 {offsets = [0, 18], sizes = [16, 16], strides = [1, 1]} : vector<16x34xf32> to vector<16x16xf32>
    %53 = tpu.concatenate %50, %51, %50, %50, %52, %50 in 1 : vector<16x1xf32>, vector<16x16xf32>, vector<16x1xf32>, vector<16x1xf32>, vector<16x16xf32>, vector<16x1xf32> -> vector<16x36xf32>
    %54 = vector.extract_strided_slice %53 {offsets = [0, 0], sizes = [16, 34], strides = [1, 1]} : vector<16x36xf32> to vector<16x34xf32>
    %55 = vector.extract_strided_slice %53 {offsets = [0, 1], sizes = [16, 34], strides = [1, 1]} : vector<16x36xf32> to vector<16x34xf32>
    %56 = vector.extract_strided_slice %53 {offsets = [0, 2], sizes = [16, 34], strides = [1, 1]} : vector<16x36xf32> to vector<16x34xf32>
    %57 = tpu.concatenate %54, %55, %56 in 0 : vector<16x34xf32>, vector<16x34xf32>, vector<16x34xf32> -> vector<48x34xf32>
    %c0_27 = arith.constant 0 : index
    %c0_28 = arith.constant 0 : index
    %58 = vector.load %arg7[%c0_27, %c0_28] : memref<16x48xf32, #tpu.memory_space<vmem>>, vector<16x48xf32>
    %cst_29 = arith.constant dense<0.000000e+00> : vector<16x34xf32>
    %59 = tpu.matmul %58, %57, %cst_29 {dimension_numbers = #tpu.dot_dimension_numbers<[1], [0], [0], [1], [0, 0, 1, 1], [], []>} : vector<16x48xf32>, vector<48x34xf32>, vector<16x34xf32> -> vector<16x34xf32>
    %c0_30 = arith.constant 0 : index
    %c0_31 = arith.constant 0 : index
    %60 = vector.load %arg8[%c0_30, %c0_31] : memref<16x1xf32, #tpu.memory_space<vmem>>, vector<16x1xf32>
    %61 = vector.broadcast %60 : vector<16x1xf32> to vector<16x34xf32>
    %62 = arith.addf %59, %61 : vector<16x34xf32>
    %cst_32 = arith.constant 0.000000e+00 : f32
    %63 = vector.broadcast %cst_32 : f32 to vector<16x34xf32>
    %64 = arith.cmpf oge, %62, %63 : vector<16x34xf32>
    %cst_33 = arith.constant 0.00999999977 : f32
    %65 = vector.broadcast %cst_33 : f32 to vector<16x34xf32>
    %66 = arith.mulf %65, %62 : vector<16x34xf32>
    %67 = arith.select %64, %62, %66 : vector<16x34xi1>, vector<16x34xf32>
    %cst_34 = arith.constant 0.000000e+00 : f32
    %68 = vector.broadcast %cst_34 : f32 to vector<16x1xf32>
    %69 = vector.extract_strided_slice %67 {offsets = [0, 0], sizes = [16, 16], strides = [1, 1]} : vector<16x34xf32> to vector<16x16xf32>
    %70 = vector.extract_strided_slice %67 {offsets = [0, 18], sizes = [16, 16], strides = [1, 1]} : vector<16x34xf32> to vector<16x16xf32>
    %71 = tpu.concatenate %68, %69, %68, %68, %70, %68 in 1 : vector<16x1xf32>, vector<16x16xf32>, vector<16x1xf32>, vector<16x1xf32>, vector<16x16xf32>, vector<16x1xf32> -> vector<16x36xf32>
    %72 = vector.extract_strided_slice %71 {offsets = [0, 0], sizes = [16, 34], strides = [1, 1]} : vector<16x36xf32> to vector<16x34xf32>
    %73 = vector.extract_strided_slice %71 {offsets = [0, 1], sizes = [16, 34], strides = [1, 1]} : vector<16x36xf32> to vector<16x34xf32>
    %74 = vector.extract_strided_slice %71 {offsets = [0, 2], sizes = [16, 34], strides = [1, 1]} : vector<16x36xf32> to vector<16x34xf32>
    %75 = tpu.concatenate %72, %73, %74 in 0 : vector<16x34xf32>, vector<16x34xf32>, vector<16x34xf32> -> vector<48x34xf32>
    %c0_35 = arith.constant 0 : index
    %c0_36 = arith.constant 0 : index
    %76 = vector.load %arg9[%c0_35, %c0_36] : memref<16x48xf32, #tpu.memory_space<vmem>>, vector<16x48xf32>
    %cst_37 = arith.constant dense<0.000000e+00> : vector<16x34xf32>
    %77 = tpu.matmul %76, %75, %cst_37 {dimension_numbers = #tpu.dot_dimension_numbers<[1], [0], [0], [1], [0, 0, 1, 1], [], []>} : vector<16x48xf32>, vector<48x34xf32>, vector<16x34xf32> -> vector<16x34xf32>
    %c0_38 = arith.constant 0 : index
    %c0_39 = arith.constant 0 : index
    %78 = vector.load %arg10[%c0_38, %c0_39] : memref<16x1xf32, #tpu.memory_space<vmem>>, vector<16x1xf32>
    %79 = vector.broadcast %78 : vector<16x1xf32> to vector<16x34xf32>
    %80 = arith.addf %77, %79 : vector<16x34xf32>
    %cst_40 = arith.constant 0.000000e+00 : f32
    %81 = vector.broadcast %cst_40 : f32 to vector<16x34xf32>
    %82 = arith.cmpf oge, %80, %81 : vector<16x34xf32>
    %cst_41 = arith.constant 0.00999999977 : f32
    %83 = vector.broadcast %cst_41 : f32 to vector<16x34xf32>
    %84 = arith.mulf %83, %80 : vector<16x34xf32>
    %85 = arith.select %82, %80, %84 : vector<16x34xi1>, vector<16x34xf32>
    %86 = vector.extract_strided_slice %53 {offsets = [0, 1], sizes = [16, 34], strides = [1, 1]} : vector<16x36xf32> to vector<16x34xf32>
    %87 = arith.addf %85, %86 : vector<16x34xf32>
    %cst_42 = arith.constant 0.000000e+00 : f32
    %88 = vector.broadcast %cst_42 : f32 to vector<16x34xf32>
    %89 = arith.cmpf oge, %87, %88 : vector<16x34xf32>
    %cst_43 = arith.constant 5.000000e-01 : f32
    %90 = vector.broadcast %cst_43 : f32 to vector<16x34xf32>
    %91 = arith.mulf %90, %87 : vector<16x34xf32>
    %92 = arith.select %89, %87, %91 : vector<16x34xi1>, vector<16x34xf32>
    %cst_44 = arith.constant 0.000000e+00 : f32
    %93 = vector.broadcast %cst_44 : f32 to vector<16x1xf32>
    %94 = vector.extract_strided_slice %92 {offsets = [0, 0], sizes = [16, 16], strides = [1, 1]} : vector<16x34xf32> to vector<16x16xf32>
    %95 = vector.extract_strided_slice %92 {offsets = [0, 18], sizes = [16, 16], strides = [1, 1]} : vector<16x34xf32> to vector<16x16xf32>
    %96 = tpu.concatenate %93, %94, %93, %93, %95, %93 in 1 : vector<16x1xf32>, vector<16x16xf32>, vector<16x1xf32>, vector<16x1xf32>, vector<16x16xf32>, vector<16x1xf32> -> vector<16x36xf32>
    %97 = vector.extract_strided_slice %96 {offsets = [0, 1], sizes = [16, 34], strides = [1, 1]} : vector<16x36xf32> to vector<16x34xf32>
    %c0_45 = arith.constant 0 : index
    %c0_46 = arith.constant 0 : index
    %98 = vector.load %arg11[%c0_45, %c0_46] : memref<16x1xf32, #tpu.memory_space<vmem>>, vector<16x1xf32>
    %99 = vector.broadcast %98 : vector<16x1xf32> to vector<16x34xf32>
    %100 = arith.mulf %99, %97 : vector<16x34xf32>
    %cst_47 = arith.constant dense<0.000000e+00> : vector<34xf32>
    %101 = vector.multi_reduction <add>, %100, %cst_47 [0] : vector<16x34xf32> to vector<34xf32>
    %102 = vector.shape_cast %101 : vector<34xf32> to vector<1x34xf32>
    %c0_48 = arith.constant 0 : index
    %c0_49 = arith.constant 0 : index
    %103 = vector.load %arg12[%c0_48, %c0_49] : memref<1x1xf32, #tpu.memory_space<vmem>>, vector<1x1xf32>
    %104 = vector.broadcast %103 : vector<1x1xf32> to vector<1x34xf32>
    %105 = arith.addf %102, %104 : vector<1x34xf32>
    %106 = math.tanh %105 : vector<1x34xf32>
    %107 = vector.extract_strided_slice %106 {offsets = [0, 0], sizes = [1, 16], strides = [1, 1]} : vector<1x34xf32> to vector<1x16xf32>
    %108 = vector.extract_strided_slice %106 {offsets = [0, 18], sizes = [1, 16], strides = [1, 1]} : vector<1x34xf32> to vector<1x16xf32>
    %109 = tpu.concatenate %107, %108 in 0 : vector<1x16xf32>, vector<1x16xf32> -> vector<2x16xf32>
    %c0_50 = arith.constant 0 : index
    %c0_51 = arith.constant 0 : index
    %110 = vector.load %arg13[%c0_50, %c0_51] : memref<2x16xf32, #tpu.memory_space<vmem>>, vector<2x16xf32>
    tpu.vector_store %arg13[%c0_50, %c0_51], %109 {strides = array<i32>} : memref<2x16xf32, #tpu.memory_space<vmem>>, vector<2x16xf32>,
    return
  }
}

</mosaic_0001>

<llo_original>
// kernel: tpu_custom_call.1
$region0: #{tpu_custom_call.1}
  #allocation0 [shape = 'u32[]', space=smem, size = 0x4, offset = 0x4, fixed_abs, tag = 'smem constant byte address 0x4 - core index']
  #allocation1 [shape = 'u32[144,128]{1,0:T(1,128)}', space=vmem, size = 0x12000, scoped, tag = 'internal scratch']
  #allocation2 [shape = 'f32[1,1]{1,0:T(1,128)S(1)}', space=vmem, size = 0x200, scoped, tag = 'scoped memory for tpu_custom_call.1']
  %s0 = inlined_call_operand.vmem [shape: f32[2,8,16], index: 0, kind: input, shape index: {}]
  %s1 = inlined_call_operand.vmem [shape: f32[16,24], index: 1, kind: input, shape index: {}]
  %s2 = inlined_call_operand.vmem [shape: f32[16,1], index: 2, kind: input, shape index: {}]
  %s3 = inlined_call_operand.vmem [shape: f32[16,48], index: 3, kind: input, shape index: {}]
  %s4 = inlined_call_operand.vmem [shape: f32[16,1], index: 4, kind: input, shape index: {}]
  %s5 = inlined_call_operand.vmem [shape: f32[16,8], index: 5, kind: input, shape index: {}]
  %s6 = inlined_call_operand.vmem [shape: f32[16,1], index: 6, kind: input, shape index: {}]
  %s7 = inlined_call_operand.vmem [shape: f32[16,48], index: 7, kind: input, shape index: {}]
  %s8 = inlined_call_operand.vmem [shape: f32[16,1], index: 8, kind: input, shape index: {}]
  %s9 = inlined_call_operand.vmem [shape: f32[16,48], index: 9, kind: input, shape index: {}]
  %s10 = inlined_call_operand.vmem [shape: f32[16,1], index: 10, kind: input, shape index: {}]
  %s11 = inlined_call_operand.vmem [shape: f32[16,1], index: 11, kind: input, shape index: {}]
  %s12 = inlined_call_operand.<no memory space> [shape: f32[1,1], index: 12, kind: input, shape index: {}]
  %s13 = inlined_call_operand.hbm [shape: f32[2,16], index: 13, kind: output, shape index: {}]
  %s14 = sld [smem:[#allocation0]]
  $region62: #{tpu_custom_call.1} parent=0
    _
  %s16 = ssub.s32 1, %s14
  %s17 = scalar_select 0, %s16, %s14
  %v18 = vstv %s12
  %19 = vst [vmem:[#allocation2] sm:$0x1] %v18
  $region1: #{tpu_custom_call.1} parent=0
    #allocation3 [shape = 'u8[1024]{0}', space=vmem, size = 0x400, scoped, tag = 'output window, operand 0, single buffered']
    #allocation4 [shape = 's32[1]{0}', space=sflag, size = 0x4, scoped, tag = 'scoped memory for tpu_custom_call.1']
    %20 = vsyncpa [#allocation4], 0
    // Predicated region
    $region2: #{tpu_custom_call.1} parent=1 // pred_check
      _
    $region3: #{tpu_custom_call.1} parent=1 // pred_check_branch
      %22 = sbr.rel (0) target = $region5
    $region4: #{tpu_custom_call.1} parent=1 // pred_region
      _
    $region5: #{tpu_custom_call.1} parent=1 // pred_fallthru
      _
    // Predicated region
    $region6: #{tpu_custom_call.1} parent=1 // pred_check
      _
    $region7: #{tpu_custom_call.1} parent=1 // pred_check_branch
      %24 = sbr.rel (0) target = $region9
    $region8: #{tpu_custom_call.1} parent=1 // pred_region
      _
    $region9: #{tpu_custom_call.1} parent=1 // pred_fallthru
      _
    // Predicated region
    $region10: #{tpu_custom_call.1} parent=1 // pred_check
      _
    $region11: #{tpu_custom_call.1} parent=1 // pred_check_branch
      %26 = sbr.rel (0) target = $region13
    $region12: #{tpu_custom_call.1} parent=1 // pred_region
      _
    $region13: #{tpu_custom_call.1} parent=1 // pred_fallthru
      _
    // Predicated region
    $region14: #{tpu_custom_call.1} parent=1 // pred_check
      _
    $region15: #{tpu_custom_call.1} parent=1 // pred_check_branch
      %28 = sbr.rel (0) target = $region17
    $region16: #{tpu_custom_call.1} parent=1 // pred_region
      _
    $region17: #{tpu_custom_call.1} parent=1 // pred_fallthru
      _
    // Predicated region
    $region18: #{tpu_custom_call.1} parent=1 // pred_check
      _
    $region19: #{tpu_custom_call.1} parent=1 // pred_check_branch
      %30 = sbr.rel (0) target = $region21
    $region20: #{tpu_custom_call.1} parent=1 // pred_region
      _
    $region21: #{tpu_custom_call.1} parent=1 // pred_fallthru
      _
    // Predicated region
    $region22: #{tpu_custom_call.1} parent=1 // pred_check
      _
    $region23: #{tpu_custom_call.1} parent=1 // pred_check_branch
      %32 = sbr.rel (0) target = $region25
    $region24: #{tpu_custom_call.1} parent=1 // pred_region
      _
    $region25: #{tpu_custom_call.1} parent=1 // pred_fallthru
      _
    // Predicated region
    $region26: #{tpu_custom_call.1} parent=1 // pred_check
      _
    $region27: #{tpu_custom_call.1} parent=1 // pred_check_branch
      %34 = sbr.rel (0) target = $region29
    $region28: #{tpu_custom_call.1} parent=1 // pred_region
      _
    $region29: #{tpu_custom_call.1} parent=1 // pred_fallthru
      _
    // Predicated region
    $region30: #{tpu_custom_call.1} parent=1 // pred_check
      _
    $region31: #{tpu_custom_call.1} parent=1 // pred_check_branch
      %36 = sbr.rel (0) target = $region33
    $region32: #{tpu_custom_call.1} parent=1 // pred_region
      _
    $region33: #{tpu_custom_call.1} parent=1 // pred_fallthru
      _
    // Predicated region
    $region34: #{tpu_custom_call.1} parent=1 // pred_check
      _
    $region35: #{tpu_custom_call.1} parent=1 // pred_check_branch
      %38 = sbr.rel (0) target = $region37
    $region36: #{tpu_custom_call.1} parent=1 // pred_region
      _
    $region37: #{tpu_custom_call.1} parent=1 // pred_fallthru
      _
    // Predicated region
    $region38: #{tpu_custom_call.1} parent=1 // pred_check
      _
    $region39: #{tpu_custom_call.1} parent=1 // pred_check_branch
      %40 = sbr.rel (0) target = $region41
    $region40: #{tpu_custom_call.1} parent=1 // pred_region
      _
    $region41: #{tpu_custom_call.1} parent=1 // pred_fallthru
      _
    // Predicated region
    $region42: #{tpu_custom_call.1} parent=1 // pred_check
      _
    $region43: #{tpu_custom_call.1} parent=1 // pred_check_branch
      %42 = sbr.rel (0) target = $region45
    $region44: #{tpu_custom_call.1} parent=1 // pred_region
      _
    $region45: #{tpu_custom_call.1} parent=1 // pred_fallthru
      _
    // Predicated region
    $region46: #{tpu_custom_call.1} parent=1 // pred_check
      _
    $region47: #{tpu_custom_call.1} parent=1 // pred_check_branch
      %44 = sbr.rel (0) target = $region49
    $region48: #{tpu_custom_call.1} parent=1 // pred_region
      _
    $region49: #{tpu_custom_call.1} parent=1 // pred_fallthru
      _
    // Predicated region
    $region50: #{tpu_custom_call.1} parent=1 // pred_check
      _
    $region51: #{tpu_custom_call.1} parent=1 // pred_check_branch
      %46 = sbr.rel (0) target = $region53
    $region52: #{tpu_custom_call.1} parent=1 // pred_region
      _
    $region53: #{tpu_custom_call.1} parent=1 // pred_fallthru
      _
    %v47 = vld [vmem:[%s0] sm:$0xff]
    %s48 = scalar_lea.vmem %s0, 8
    %v49 = vld [vmem:[%s48] sm:$0xff]
    %51 = vrot.lane.b32.xlu0 %v47, 1
    %v52 = vpop.permute.xlu0 %51
    %55 = vrot.lane.b32.xlu0 %v49, 19
    %v56 = vpop.permute.xlu0 %55
    %vm58 = vcmask 7168
    %v59 = vsel %vm58, 0.0, %v52
    %vm60 = vcmask 138240
    %v61 = vsel %vm60, %v59, 0.0
    %vm62 = vcmask 146432
    %v63 = vsel %vm62, %v61, 0.0
    %vm64 = vcmask 154624
    %v65 = vsel %vm64, %v63, %v56
    %vm66 = vcmask 285696
    %v67 = vsel %vm66, %v65, 0.0
    %69 = vrot.lane.b32.xlu0 %v67, 127
    %v70 = vpop.permute.xlu0 %69
    %72 = vrot.lane.b32.xlu0 %v67, 126
    %v73 = vpop.permute.xlu0 %72
    %v75 = vld [vmem:[%s1] sm:$0xff]
    %v76 = vld [vmem:[%s1 + $0x8] sm:$0xff]
    %v77 = vld [vmem:[%s2] sm:$0xff]
    %v78 = vld [vmem:[%s2 + $0x8] sm:$0xff]
    %80 = vset.pattern.permute.xlu0 0
    %81 = vperm.xlu0 %80, %v77
    %v82 = vpop.permute.xlu0 %81
    %85 = vset.pattern.permute.xlu0 0
    %86 = vperm.xlu0 %85, %v78
    %v87 = vpop.permute.xlu0 %86
    %vm89 = vcmask 195584
    %v91 = vsel %vm89, %v75, 0
    %v94 = vsel %vm89, %v76, 0
    %96 = vmatprep.subr.mxu0 0.0
    %97 = vmatpush1.msra.mxu0 %v67
    %98 = vmatprep.subr.mxu0 0.0
    %99 = vmatpush1.msra.mxu0 %v70
    %100 = vmatprep.subr.mxu0 0.0
    %101 = vmatpush1.msra.mxu0 %v73
    %102 = vmatprep.subr.mxu0 0.0
    %103 = vmatpush1.msra.mxu0 0.0
    %104 = vmatprep.subr.mxu0 0.0
    %105 = vmatpush1.msra.mxu0 0.0
    %106 = vmatprep.subr.mxu0 0.0
    %107 = vmatpush1.msra.mxu0 0.0
    %108 = vmatprep.subr.mxu0 0.0
    %109 = vmatpush1.msra.mxu0 0.0
    %110 = vmatprep.subr.mxu0 0.0
    %111 = vmatpush1.msra.mxu0 0.0
    %112 = vmatprep.subr.mxu0 0.0
    %113 = vmatpush1.msra.mxu0 0.0
    %114 = vmatprep.subr.mxu0 0.0
    %115 = vmatpush1.msra.mxu0 0.0
    %116 = vmatprep.subr.mxu0 0.0
    %117 = vmatpush1.msra.mxu0 0.0
    %118 = vmatprep.subr.mxu0 0.0
    %119 = vmatpush1.msra.mxu0 0.0
    %120 = vmatprep.subr.mxu0 0.0
    %121 = vmatpush1.msra.mxu0 0.0
    %122 = vmatprep.subr.mxu0 0.0
    %123 = vmatpush1.msra.mxu0 0.0
    %124 = vmatprep.subr.mxu0 0.0
    %125 = vmatpush1.msra.mxu0 0.0
    %126 = vmatprep.subr.mxu0 0.0
    %127 = vmatpush1.msra.mxu0 0.0
    %128 = vmatprep.subr.mxu0 0.0
    %129 = vmatpush1.msra.mxu0 0.0
    %130 = vmatprep.subr.mxu0 0.0
    %131 = vmatpush1.msra.mxu0 0.0
    %132 = vmatprep.subr.mxu0 0.0
    %133 = vmatpush1.msra.mxu0 0.0
    %134 = vmatprep.subr.mxu0 0.0
    %135 = vmatpush1.msra.mxu0 0.0
    %136 = vmatprep.subr.mxu0 0.0
    %137 = vmatpush1.msra.mxu0 0.0
    %138 = vmatprep.subr.mxu0 0.0
    %139 = vmatpush1.msra.mxu0 0.0
    %140 = vmatprep.subr.mxu0 0.0
    %141 = vmatpush1.msra.mxu0 0.0
    %142 = vmatprep.subr.mxu0 0.0
    %143 = vmatpush1.msra.mxu0 0.0
    %144 = vmatprep.subr.mxu0 0.0
    %145 = vmatpush1.msra.mxu0 0.0
    %146 = vmatprep.subr.mxu0 0.0
    %147 = vmatpush1.msra.mxu0 0.0
    %148 = vmatprep.subr.mxu0 0.0
    %149 = vmatpush1.msra.mxu0 0.0
    %150 = vmatprep.subr.mxu0 0.0
    %151 = vmatpush1.msra.mxu0 0.0
    %152 = vmatprep.subr.mxu0 0.0
    %153 = vmatpush1.msra.mxu0 0.0
    %154 = vmatprep.subr.mxu0 0.0
    %155 = vmatpush1.msra.mxu0 0.0
    %156 = vmatprep.subr.mxu0 0.0
    %157 = vmatpush1.msra.mxu0 0.0
    %158 = vmatprep.subr.mxu0 0.0
    %159 = vmatpush1.msra.mxu0 0.0
    %160 = vmatprep.mubr.f32.mxu0 0.0
    %161 = vmatmul.mubr.f32.gmra.mrb[0].mxu0 %v91
    %v162 = vpop.f32.mrb[0].mxu0
    %v163 = vadd.f32 %v82, %v162
    %v164 = vpop.f32.mrb[0].mxu0
    %165 = vmatprep.mubr.f32.mxu0 0.0
    %166 = vmatmul.mubr.f32.gmra.mrb[0].mxu0 %v94
    %v167 = vpop.f32.mrb[0].mxu0
    %v168 = vadd.f32 %v87, %v167
    %v169 = vpop.f32.mrb[0].mxu0
    %170 = vdwg.mxu0
    %vm171 = vcmp.ge.f32.partialorder %v163, 0.0
    %vm172 = vcmp.ge.f32.partialorder %v168, 0.0
    %v173 = vmul.f32 %v163, 0.01
    %v174 = vmul.f32 %v168, 0.01
    %v175 = vsel %vm171, %v163, %v173
    %v176 = vsel %vm172, %v168, %v174
    %179 = vrot.lane.b32.xlu0 %v175, 1
    %v180 = vpop.permute.xlu0 %179
    %181 = vrot.lane.b32.xlu0 %v176, 1
    %v182 = vpop.permute.xlu0 %181
    %v185 = vsel %vm58, 0.0, %v180
    %v186 = vsel %vm58, 0.0, %v182
    %v187 = vsel %vm60, %v185, 0.0
    %v188 = vsel %vm60, %v186, 0.0
    %v189 = vsel %vm62, %v187, 0.0
    %v190 = vsel %vm62, %v188, 0.0
    %v191 = vsel %vm64, %v189, %v180
    %v192 = vsel %vm64, %v190, %v182
    %v193 = vsel %vm66, %v191, 0.0
    %v194 = vsel %vm66, %v192, 0.0
    %197 = vrot.lane.b32.xlu0 %v193, 127
    %v198 = vpop.permute.xlu0 %197
    %199 = vrot.lane.b32.xlu0 %v194, 127
    %v200 = vpop.permute.xlu0 %199
    %203 = vrot.lane.b32.xlu0 %v193, 126
    %v204 = vpop.permute.xlu0 %203
    %205 = vrot.lane.b32.xlu0 %v194, 126
    %v206 = vpop.permute.xlu0 %205
    %v209 = vld [vmem:[%s3] sm:$0xff]
    %v210 = vld [vmem:[%s3 + $0x8] sm:$0xff]
    %v211 = vld [vmem:[%s4] sm:$0xff]
    %v212 = vld [vmem:[%s4 + $0x8] sm:$0xff]
    %214 = vset.pattern.permute.xlu0 0
    %215 = vperm.xlu0 %214, %v211
    %v216 = vpop.permute.xlu0 %215
    %219 = vset.pattern.permute.xlu0 0
    %220 = vperm.xlu0 %219, %v212
    %v221 = vpop.permute.xlu0 %220
    %vm223 = vcmask 392192
    %v225 = vsel %vm223, %v209, 0
    %v228 = vsel %vm223, %v210, 0
    %230 = vmatprep.subr.mxu0 0.0
    %231 = vmatpush1.msra.mxu0 %v193
    %232 = vmatprep.subr.mxu0 0.0
    %233 = vmatpush1.msra.mxu0 %v194
    %234 = vmatprep.subr.mxu0 0.0
    %235 = vmatpush1.msra.mxu0 %v198
    %236 = vmatprep.subr.mxu0 0.0
    %237 = vmatpush1.msra.mxu0 %v200
    %238 = vmatprep.subr.mxu0 0.0
    %239 = vmatpush1.msra.mxu0 %v204
    %240 = vmatprep.subr.mxu0 0.0
    %241 = vmatpush1.msra.mxu0 %v206
    %242 = vmatprep.subr.mxu0 0.0
    %243 = vmatpush1.msra.mxu0 0.0
    %244 = vmatprep.subr.mxu0 0.0
    %245 = vmatpush1.msra.mxu0 0.0
    %246 = vmatprep.subr.mxu0 0.0
    %247 = vmatpush1.msra.mxu0 0.0
    %248 = vmatprep.subr.mxu0 0.0
    %249 = vmatpush1.msra.mxu0 0.0
    %250 = vmatprep.subr.mxu0 0.0
    %251 = vmatpush1.msra.mxu0 0.0
    %252 = vmatprep.subr.mxu0 0.0
    %253 = vmatpush1.msra.mxu0 0.0
    %254 = vmatprep.subr.mxu0 0.0
    %255 = vmatpush1.msra.mxu0 0.0
    %256 = vmatprep.subr.mxu0 0.0
    %257 = vmatpush1.msra.mxu0 0.0
    %258 = vmatprep.subr.mxu0 0.0
    %259 = vmatpush1.msra.mxu0 0.0
    %260 = vmatprep.subr.mxu0 0.0
    %261 = vmatpush1.msra.mxu0 0.0
    %262 = vmatprep.subr.mxu0 0.0
    %263 = vmatpush1.msra.mxu0 0.0
    %264 = vmatprep.subr.mxu0 0.0
    %265 = vmatpush1.msra.mxu0 0.0
    %266 = vmatprep.subr.mxu0 0.0
    %267 = vmatpush1.msra.mxu0 0.0
    %268 = vmatprep.subr.mxu0 0.0
    %269 = vmatpush1.msra.mxu0 0.0
    %270 = vmatprep.subr.mxu0 0.0
    %271 = vmatpush1.msra.mxu0 0.0
    %272 = vmatprep.subr.mxu0 0.0
    %273 = vmatpush1.msra.mxu0 0.0
    %274 = vmatprep.subr.mxu0 0.0
    %275 = vmatpush1.msra.mxu0 0.0
    %276 = vmatprep.subr.mxu0 0.0
    %277 = vmatpush1.msra.mxu0 0.0
    %278 = vmatprep.subr.mxu0 0.0
    %279 = vmatpush1.msra.mxu0 0.0
    %280 = vmatprep.subr.mxu0 0.0
    %281 = vmatpush1.msra.mxu0 0.0
    %282 = vmatprep.subr.mxu0 0.0
    %283 = vmatpush1.msra.mxu0 0.0
    %284 = vmatprep.subr.mxu0 0.0
    %285 = vmatpush1.msra.mxu0 0.0
    %286 = vmatprep.subr.mxu0 0.0
    %287 = vmatpush1.msra.mxu0 0.0
    %288 = vmatprep.subr.mxu0 0.0
    %289 = vmatpush1.msra.mxu0 0.0
    %290 = vmatprep.subr.mxu0 0.0
    %291 = vmatpush1.msra.mxu0 0.0
    %292 = vmatprep.subr.mxu0 0.0
    %293 = vmatpush1.msra.mxu0 0.0
    %294 = vmatprep.mubr.f32.mxu0 0.0
    %295 = vmatmul.mubr.f32.gmra.mrb[0].mxu0 %v225
    %v296 = vpop.f32.mrb[0].mxu0
    %v297 = vadd.f32 %v216, %v296
    %v298 = vpop.f32.mrb[0].mxu0
    %299 = vmatprep.mubr.f32.mxu0 0.0
    %300 = vmatmul.mubr.f32.gmra.mrb[0].mxu0 %v228
    %v301 = vpop.f32.mrb[0].mxu0
    %v302 = vadd.f32 %v221, %v301
    %v303 = vpop.f32.mrb[0].mxu0
    %304 = vdwg.mxu0
    %vm305 = vcmp.ge.f32.partialorder %v297, 0.0
    %vm306 = vcmp.ge.f32.partialorder %v302, 0.0
    %v307 = vmul.f32 %v297, 0.01
    %v308 = vmul.f32 %v302, 0.01
    %v309 = vsel %vm305, %v297, %v307
    %v310 = vsel %vm306, %v302, %v308
    %v311 = vld [vmem:[%s5] sm:$0xff]
    %v312 = vld [vmem:[%s5 + $0x8] sm:$0xff]
    %v313 = vld [vmem:[%s6] sm:$0xff]
    %v314 = vld [vmem:[%s6 + $0x8] sm:$0xff]
    %316 = vset.pattern.permute.xlu0 0
    %317 = vperm.xlu0 %316, %v313
    %v318 = vpop.permute.xlu0 %317
    %321 = vset.pattern.permute.xlu0 0
    %322 = vperm.xlu0 %321, %v314
    %v323 = vpop.permute.xlu0 %322
    %vm325 = vcmask 64512
    %v327 = vsel %vm325, %v311, 0
    %v330 = vsel %vm325, %v312, 0
    %332 = vmatprep.subr.mxu0 0.0
    %333 = vmatpush1.msra.mxu0 %v70
    %334 = vmatprep.subr.mxu0 0.0
    %335 = vmatpush1.msra.mxu0 0.0
    %336 = vmatprep.subr.mxu0 0.0
    %337 = vmatpush1.msra.mxu0 0.0
    %338 = vmatprep.subr.mxu0 0.0
    %339 = vmatpush1.msra.mxu0 0.0
    %340 = vmatprep.subr.mxu0 0.0
    %341 = vmatpush1.msra.mxu0 0.0
    %342 = vmatprep.subr.mxu0 0.0
    %343 = vmatpush1.msra.mxu0 0.0
    %344 = vmatprep.subr.mxu0 0.0
    %345 = vmatpush1.msra.mxu0 0.0
    %346 = vmatprep.subr.mxu0 0.0
    %347 = vmatpush1.msra.mxu0 0.0
    %348 = vmatprep.subr.mxu0 0.0
    %349 = vmatpush1.msra.mxu0 0.0
    %350 = vmatprep.subr.mxu0 0.0
    %351 = vmatpush1.msra.mxu0 0.0
    %352 = vmatprep.subr.mxu0 0.0
    %353 = vmatpush1.msra.mxu0 0.0
    %354 = vmatprep.subr.mxu0 0.0
    %355 = vmatpush1.msra.mxu0 0.0
    %356 = vmatprep.subr.mxu0 0.0
    %357 = vmatpush1.msra.mxu0 0.0
    %358 = vmatprep.subr.mxu0 0.0
    %359 = vmatpush1.msra.mxu0 0.0
    %360 = vmatprep.subr.mxu0 0.0
    %361 = vmatpush1.msra.mxu0 0.0
    %362 = vmatprep.subr.mxu0 0.0
    %363 = vmatpush1.msra.mxu0 0.0
    %364 = vmatprep.subr.mxu0 0.0
    %365 = vmatpush1.msra.mxu0 0.0
    %366 = vmatprep.subr.mxu0 0.0
    %367 = vmatpush1.msra.mxu0 0.0
    %368 = vmatprep.subr.mxu0 0.0
    %369 = vmatpush1.msra.mxu0 0.0
    %370 = vmatprep.subr.mxu0 0.0
    %371 = vmatpush1.msra.mxu0 0.0
    %372 = vmatprep.subr.mxu0 0.0
    %373 = vmatpush1.msra.mxu0 0.0
    %374 = vmatprep.subr.mxu0 0.0
    %375 = vmatpush1.msra.mxu0 0.0
    %376 = vmatprep.subr.mxu0 0.0
    %377 = vmatpush1.msra.mxu0 0.0
    %378 = vmatprep.subr.mxu0 0.0
    %379 = vmatpush1.msra.mxu0 0.0
    %380 = vmatprep.subr.mxu0 0.0
    %381 = vmatpush1.msra.mxu0 0.0
    %382 = vmatprep.subr.mxu0 0.0
    %383 = vmatpush1.msra.mxu0 0.0
    %384 = vmatprep.subr.mxu0 0.0
    %385 = vmatpush1.msra.mxu0 0.0
    %386 = vmatprep.subr.mxu0 0.0
    %387 = vmatpush1.msra.mxu0 0.0
    %388 = vmatprep.subr.mxu0 0.0
    %389 = vmatpush1.msra.mxu0 0.0
    %390 = vmatprep.subr.mxu0 0.0
    %391 = vmatpush1.msra.mxu0 0.0
    %392 = vmatprep.subr.mxu0 0.0
    %393 = vmatpush1.msra.mxu0 0.0
    %394 = vmatprep.subr.mxu0 0.0
    %395 = vmatpush1.msra.mxu0 0.0
    %396 = vmatprep.mubr.f32.mxu0 0.0
    %397 = vmatmul.mubr.f32.gmra.mrb[0].mxu0 %v327
    %v398 = vpop.f32.mrb[0].mxu0
    %v399 = vadd.f32 %v318, %v398
    %v400 = vpop.f32.mrb[0].mxu0
    %401 = vmatprep.mubr.f32.mxu0 0.0
    %402 = vmatmul.mubr.f32.gmra.mrb[0].mxu0 %v330
    %v403 = vpop.f32.mrb[0].mxu0
    %v404 = vadd.f32 %v323, %v403
    %v405 = vpop.f32.mrb[0].mxu0
    %406 = vdwg.mxu0
    %v407 = vadd.f32 %v309, %v399
    %v408 = vadd.f32 %v310, %v404
    %vm409 = vcmp.ge.f32.partialorder %v407, 0.0
    %vm410 = vcmp.ge.f32.partialorder %v408, 0.0
    %v411 = vmul.f32 %v407, 0.5
    %v412 = vmul.f32 %v408, 0.5
    %v413 = vsel %vm409, %v407, %v411
    %v414 = vsel %vm410, %v408, %v412
    %417 = vrot.lane.b32.xlu0 %v413, 1
    %v418 = vpop.permute.xlu0 %417
    %419 = vrot.lane.b32.xlu0 %v414, 1
    %v420 = vpop.permute.xlu0 %419
    %v423 = vsel %vm58, 0.0, %v418
    %v424 = vsel %vm58, 0.0, %v420
    %v425 = vsel %vm60, %v423, 0.0
    %v426 = vsel %vm60, %v424, 0.0
    %v427 = vsel %vm62, %v425, 0.0
    %v428 = vsel %vm62, %v426, 0.0
    %v429 = vsel %vm64, %v427, %v418
    %v430 = vsel %vm64, %v428, %v420
    %v431 = vsel %vm66, %v429, 0.0
    %v432 = vsel %vm66, %v430, 0.0
    %435 = vrot.lane.b32.xlu0 %v431, 127
    %v436 = vpop.permute.xlu0 %435
    %437 = vrot.lane.b32.xlu0 %v432, 127
    %v438 = vpop.permute.xlu0 %437
    %441 = vrot.lane.b32.xlu0 %v431, 126
    %v442 = vpop.permute.xlu0 %441
    %443 = vrot.lane.b32.xlu0 %v432, 126
    %v444 = vpop.permute.xlu0 %443
    %v447 = vld [vmem:[%s7] sm:$0xff]
    %v448 = vld [vmem:[%s7 + $0x8] sm:$0xff]
    %v449 = vld [vmem:[%s8] sm:$0xff]
    %v450 = vld [vmem:[%s8 + $0x8] sm:$0xff]
    %452 = vset.pattern.permute.xlu0 0
    %453 = vperm.xlu0 %452, %v449
    %v454 = vpop.permute.xlu0 %453
    %457 = vset.pattern.permute.xlu0 0
    %458 = vperm.xlu0 %457, %v450
    %v459 = vpop.permute.xlu0 %458
    %v462 = vsel %vm223, %v447, 0
    %v465 = vsel %vm223, %v448, 0
    %467 = vmatprep.subr.mxu0 0.0
    %468 = vmatpush1.msra.mxu0 %v431
    %469 = vmatprep.subr.mxu0 0.0
    %470 = vmatpush1.msra.mxu0 %v432
    %471 = vmatprep.subr.mxu0 0.0
    %472 = vmatpush1.msra.mxu0 %v436
    %473 = vmatprep.subr.mxu0 0.0
    %474 = vmatpush1.msra.mxu0 %v438
    %475 = vmatprep.subr.mxu0 0.0
    %476 = vmatpush1.msra.mxu0 %v442
    %477 = vmatprep.subr.mxu0 0.0
    %478 = vmatpush1.msra.mxu0 %v444
    %479 = vmatprep.subr.mxu0 0.0
    %480 = vmatpush1.msra.mxu0 0.0
    %481 = vmatprep.subr.mxu0 0.0
    %482 = vmatpush1.msra.mxu0 0.0
    %483 = vmatprep.subr.mxu0 0.0
    %484 = vmatpush1.msra.mxu0 0.0
    %485 = vmatprep.subr.mxu0 0.0
    %486 = vmatpush1.msra.mxu0 0.0
    %487 = vmatprep.subr.mxu0 0.0
    %488 = vmatpush1.msra.mxu0 0.0
    %489 = vmatprep.subr.mxu0 0.0
    %490 = vmatpush1.msra.mxu0 0.0
    %491 = vmatprep.subr.mxu0 0.0
    %492 = vmatpush1.msra.mxu0 0.0
    %493 = vmatprep.subr.mxu0 0.0
    %494 = vmatpush1.msra.mxu0 0.0
    %495 = vmatprep.subr.mxu0 0.0
    %496 = vmatpush1.msra.mxu0 0.0
    %497 = vmatprep.subr.mxu0 0.0
    %498 = vmatpush1.msra.mxu0 0.0
    %499 = vmatprep.subr.mxu0 0.0
    %500 = vmatpush1.msra.mxu0 0.0
    %501 = vmatprep.subr.mxu0 0.0
    %502 = vmatpush1.msra.mxu0 0.0
    %503 = vmatprep.subr.mxu0 0.0
    %504 = vmatpush1.msra.mxu0 0.0
    %505 = vmatprep.subr.mxu0 0.0
    %506 = vmatpush1.msra.mxu0 0.0
    %507 = vmatprep.subr.mxu0 0.0
    %508 = vmatpush1.msra.mxu0 0.0
    %509 = vmatprep.subr.mxu0 0.0
    %510 = vmatpush1.msra.mxu0 0.0
    %511 = vmatprep.subr.mxu0 0.0
    %512 = vmatpush1.msra.mxu0 0.0
    %513 = vmatprep.subr.mxu0 0.0
    %514 = vmatpush1.msra.mxu0 0.0
    %515 = vmatprep.subr.mxu0 0.0
    %516 = vmatpush1.msra.mxu0 0.0
    %517 = vmatprep.subr.mxu0 0.0
    %518 = vmatpush1.msra.mxu0 0.0
    %519 = vmatprep.subr.mxu0 0.0
    %520 = vmatpush1.msra.mxu0 0.0
    %521 = vmatprep.subr.mxu0 0.0
    %522 = vmatpush1.msra.mxu0 0.0
    %523 = vmatprep.subr.mxu0 0.0
    %524 = vmatpush1.msra.mxu0 0.0
    %525 = vmatprep.subr.mxu0 0.0
    %526 = vmatpush1.msra.mxu0 0.0
    %527 = vmatprep.subr.mxu0 0.0
    %528 = vmatpush1.msra.mxu0 0.0
    %529 = vmatprep.subr.mxu0 0.0
    %530 = vmatpush1.msra.mxu0 0.0
    %531 = vmatprep.mubr.f32.mxu0 0.0
    %532 = vmatmul.mubr.f32.gmra.mrb[0].mxu0 %v462
    %v533 = vpop.f32.mrb[0].mxu0
    %v534 = vadd.f32 %v454, %v533
    %v535 = vpop.f32.mrb[0].mxu0
    %536 = vmatprep.mubr.f32.mxu0 0.0
    %537 = vmatmul.mubr.f32.gmra.mrb[0].mxu0 %v465
    %v538 = vpop.f32.mrb[0].mxu0
    %v539 = vadd.f32 %v459, %v538
    %v540 = vpop.f32.mrb[0].mxu0
    %541 = vdwg.mxu0
    %vm542 = vcmp.ge.f32.partialorder %v534, 0.0
    %vm543 = vcmp.ge.f32.partialorder %v539, 0.0
    %v544 = vmul.f32 %v534, 0.01
    %v545 = vmul.f32 %v539, 0.01
    %v546 = vsel %vm542, %v534, %v544
    %v547 = vsel %vm543, %v539, %v545
    %550 = vrot.lane.b32.xlu0 %v546, 1
    %v551 = vpop.permute.xlu0 %550
    %552 = vrot.lane.b32.xlu0 %v547, 1
    %v553 = vpop.permute.xlu0 %552
    %v556 = vsel %vm58, 0.0, %v551
    %v557 = vsel %vm58, 0.0, %v553
    %v558 = vsel %vm60, %v556, 0.0
    %v559 = vsel %vm60, %v557, 0.0
    %v560 = vsel %vm62, %v558, 0.0
    %v561 = vsel %vm62, %v559, 0.0
    %v562 = vsel %vm64, %v560, %v551
    %v563 = vsel %vm64, %v561, %v553
    %v564 = vsel %vm66, %v562, 0.0
    %v565 = vsel %vm66, %v563, 0.0
    %568 = vrot.lane.b32.xlu0 %v564, 127
    %v569 = vpop.permute.xlu0 %568
    %570 = vrot.lane.b32.xlu0 %v565, 127
    %v571 = vpop.permute.xlu0 %570
    %574 = vrot.lane.b32.xlu0 %v564, 126
    %v575 = vpop.permute.xlu0 %574
    %576 = vrot.lane.b32.xlu0 %v565, 126
    %v577 = vpop.permute.xlu0 %576
    %v580 = vld [vmem:[%s9] sm:$0xff]
    %v581 = vld [vmem:[%s9 + $0x8] sm:$0xff]
    %v582 = vld [vmem:[%s10] sm:$0xff]
    %v583 = vld [vmem:[%s10 + $0x8] sm:$0xff]
    %585 = vset.pattern.permute.xlu0 0
    %586 = vperm.xlu0 %585, %v582
    %v587 = vpop.permute.xlu0 %586
    %590 = vset.pattern.permute.xlu0 0
    %591 = vperm.xlu0 %590, %v583
    %v592 = vpop.permute.xlu0 %591
    %v595 = vsel %vm223, %v580, 0
    %v598 = vsel %vm223, %v581, 0
    %600 = vmatprep.subr.mxu0 0.0
    %601 = vmatpush1.msra.mxu0 %v564
    %602 = vmatprep.subr.mxu0 0.0
    %603 = vmatpush1.msra.mxu0 %v565
    %604 = vmatprep.subr.mxu0 0.0
    %605 = vmatpush1.msra.mxu0 %v569
    %606 = vmatprep.subr.mxu0 0.0
    %607 = vmatpush1.msra.mxu0 %v571
    %608 = vmatprep.subr.mxu0 0.0
    %609 = vmatpush1.msra.mxu0 %v575
    %610 = vmatprep.subr.mxu0 0.0
    %611 = vmatpush1.msra.mxu0 %v577
    %612 = vmatprep.subr.mxu0 0.0
    %613 = vmatpush1.msra.mxu0 0.0
    %614 = vmatprep.subr.mxu0 0.0
    %615 = vmatpush1.msra.mxu0 0.0
    %616 = vmatprep.subr.mxu0 0.0
    %617 = vmatpush1.msra.mxu0 0.0
    %618 = vmatprep.subr.mxu0 0.0
    %619 = vmatpush1.msra.mxu0 0.0
    %620 = vmatprep.subr.mxu0 0.0
    %621 = vmatpush1.msra.mxu0 0.0
    %622 = vmatprep.subr.mxu0 0.0
    %623 = vmatpush1.msra.mxu0 0.0
    %624 = vmatprep.subr.mxu0 0.0
    %625 = vmatpush1.msra.mxu0 0.0
    %626 = vmatprep.subr.mxu0 0.0
    %627 = vmatpush1.msra.mxu0 0.0
    %628 = vmatprep.subr.mxu0 0.0
    %629 = vmatpush1.msra.mxu0 0.0
    %630 = vmatprep.subr.mxu0 0.0
    %631 = vmatpush1.msra.mxu0 0.0
    %632 = vmatprep.subr.mxu0 0.0
    %633 = vmatpush1.msra.mxu0 0.0
    %634 = vmatprep.subr.mxu0 0.0
    %635 = vmatpush1.msra.mxu0 0.0
    %636 = vmatprep.subr.mxu0 0.0
    %637 = vmatpush1.msra.mxu0 0.0
    %638 = vmatprep.subr.mxu0 0.0
    %639 = vmatpush1.msra.mxu0 0.0
    %640 = vmatprep.subr.mxu0 0.0
    %641 = vmatpush1.msra.mxu0 0.0
    %642 = vmatprep.subr.mxu0 0.0
    %643 = vmatpush1.msra.mxu0 0.0
    %644 = vmatprep.subr.mxu0 0.0
    %645 = vmatpush1.msra.mxu0 0.0
    %646 = vmatprep.subr.mxu0 0.0
    %647 = vmatpush1.msra.mxu0 0.0
    %648 = vmatprep.subr.mxu0 0.0
    %649 = vmatpush1.msra.mxu0 0.0
    %650 = vmatprep.subr.mxu0 0.0
    %651 = vmatpush1.msra.mxu0 0.0
    %652 = vmatprep.subr.mxu0 0.0
    %653 = vmatpush1.msra.mxu0 0.0
    %654 = vmatprep.subr.mxu0 0.0
    %655 = vmatpush1.msra.mxu0 0.0
    %656 = vmatprep.subr.mxu0 0.0
    %657 = vmatpush1.msra.mxu0 0.0
    %658 = vmatprep.subr.mxu0 0.0
    %659 = vmatpush1.msra.mxu0 0.0
    %660 = vmatprep.subr.mxu0 0.0
    %661 = vmatpush1.msra.mxu0 0.0
    %662 = vmatprep.subr.mxu0 0.0
    %663 = vmatpush1.msra.mxu0 0.0
    %664 = vmatprep.mubr.f32.mxu0 0.0
    %665 = vmatmul.mubr.f32.gmra.mrb[0].mxu0 %v595
    %v666 = vpop.f32.mrb[0].mxu0
    %v667 = vadd.f32 %v587, %v666
    %v668 = vpop.f32.mrb[0].mxu0
    %669 = vmatprep.mubr.f32.mxu0 0.0
    %670 = vmatmul.mubr.f32.gmra.mrb[0].mxu0 %v598
    %v671 = vpop.f32.mrb[0].mxu0
    %v672 = vadd.f32 %v592, %v671
    %v673 = vpop.f32.mrb[0].mxu0
    %674 = vdwg.mxu0
    %vm675 = vcmp.ge.f32.partialorder %v667, 0.0
    %vm676 = vcmp.ge.f32.partialorder %v672, 0.0
    %v677 = vmul.f32 %v667, 0.01
    %v678 = vmul.f32 %v672, 0.01
    %v679 = vsel %vm675, %v667, %v677
    %v680 = vsel %vm676, %v672, %v678
    %v681 = vadd.f32 %v679, %v436
    %v682 = vadd.f32 %v680, %v438
    %vm683 = vcmp.ge.f32.partialorder %v681, 0.0
    %vm684 = vcmp.ge.f32.partialorder %v682, 0.0
    %v685 = vmul.f32 %v681, 0.5
    %v686 = vmul.f32 %v682, 0.5
    %v687 = vsel %vm683, %v681, %v685
    %v688 = vsel %vm684, %v682, %v686
    %691 = vrot.lane.b32.xlu0 %v687, 1
    %v692 = vpop.permute.xlu0 %691
    %693 = vrot.lane.b32.xlu0 %v688, 1
    %v694 = vpop.permute.xlu0 %693
    %v697 = vsel %vm58, 0.0, %v692
    %v698 = vsel %vm58, 0.0, %v694
    %v699 = vsel %vm60, %v697, 0.0
    %v700 = vsel %vm60, %v698, 0.0
    %v701 = vsel %vm62, %v699, 0.0
    %v702 = vsel %vm62, %v700, 0.0
    %v703 = vsel %vm64, %v701, %v692
    %v704 = vsel %vm64, %v702, %v694
    %v705 = vsel %vm66, %v703, 0.0
    %v706 = vsel %vm66, %v704, 0.0
    %v707 = vld [vmem:[%s11] sm:$0xff]
    %v708 = vld [vmem:[%s11 + $0x8] sm:$0xff]
    %710 = vset.pattern.permute.xlu0 0
    %711 = vperm.xlu0 %710, %v707
    %v712 = vpop.permute.xlu0 %711
    %715 = vset.pattern.permute.xlu0 0
    %716 = vperm.xlu0 %715, %v708
    %v717 = vpop.permute.xlu0 %716
    %v719 = vmul.f32 %v712, %v705
    %v720 = vmul.f32 %v717, %v706
    %vm721 = vcmask 285704
    %v722 = vsel %vm721, %v719, 0.0
    %v723 = vsel %vm721, %v720, 0.0
    %v724 = vadd.f32 %v722, %v723
    %v725 = vrot.slane %v724, 4
    %v726 = vadd.f32 %v724, %v725
    %v727 = vrot.slane %v726, 2
    %v728 = vadd.f32 %v726, %v727
    %v729 = vrot.slane %v728, 1
    %v730 = vadd.f32 %v728, %v729
    %v731 = vld [vmem:[#allocation2] sm:$0x1]
    %733 = vset.pattern.permute.xlu0 0
    %734 = vperm.xlu0 %733, %v731
    %v735 = vpop.permute.xlu0 %734
    %v737 = vlaneseq
    %v738 = vshrl.u32 %v737, 7
    %v739 = vsub.s32 0, %v738
    %v740 = vrot.slane %v735, %v739
    %v741 = vadd.f32 %v730, %v740
    %v742 = vtanh.pop %v741
    %744 = vrot.lane.b32.xlu0 %v742, 110
    %v745 = vpop.permute.xlu0 %744
    %vm747 = vcmask 1040384
    %v748 = vsel %vm747, %v742, %v745
    %750 = vrot.lane.b32.xlu0 %v748, 127
    %v751 = vpop.permute.xlu0 %750
    %vm753 = vcmask 123904
    %754 = vst.msk [vmem:[#allocation3] sm:$0x3] %vm753, %v751
    // Predicated region
    $region54: #{tpu_custom_call.1} parent=1 // pred_check
      _
    $region55: #{tpu_custom_call.1} parent=1 // pred_check_branch
      %756 = sbr.rel (0) target = $region57
    $region56: #{tpu_custom_call.1} parent=1 // pred_region
      %s758 = ssub.s32 32, 32
      %759 = vsyncadd [#allocation4], %s758
      %s761 = sshll.u32 [#allocation3], 4
      %s762 = int_to_ptr.vmem [resolvable:$true] %s761
      %764 = dma.vmem_to_hbm [thread:$0]  %s762, 32, %s13, [#allocation4]
    $region57: #{tpu_custom_call.1} parent=1 // pred_fallthru
      _
    // Predicated region
    $region58: #{tpu_custom_call.1} parent=1 // pred_check
      _
    $region59: #{tpu_custom_call.1} parent=1 // pred_check_branch
      %766 = sbr.rel (0) target = $region61
    $region60: #{tpu_custom_call.1} parent=1 // pred_region
      %767 = dma.done [#allocation4], 32
    $region61: #{tpu_custom_call.1} parent=1 // pred_fallthru
      _
    %768 = vsyncpa [#allocation4], 1

</llo_original>
